<compile_context>
chip_gen: v6e
topology: v6e:2x2x1
jax: 0.10.0
libtpu: 0.0.40
codegen_flags: <defaults>
</compile_context>

<pallas_src>
import jax
import jax.numpy as jnp
from jax.experimental import pallas as pl
from jax.experimental.pallas import tpu as pltpu


def _gru_cell_kernel(x_ref, h_ref, wx_ref, wh_ref, u_ref, out_ref):
    H = out_ref.shape[-1]
    mxu_dtype = wx_ref.dtype  # bf16 (perf path) or f32 storage dtype of weights

    x = x_ref[...].astype(mxu_dtype)
    h_f32 = h_ref[...].astype(jnp.float32)
    h = h_f32.astype(mxu_dtype)

    # Fused input-side projection: [B, I] @ [I, 3H] = [x@Wz | x@Wr | x@W].
    gx = jnp.dot(x, wx_ref[...], preferred_element_type=jnp.float32)
    # Fused hidden-side gate projection: [B, H] @ [H, 2H] = [h@Uz | h@Ur].
    gh = jnp.dot(h, wh_ref[...], preferred_element_type=jnp.float32)

    # z_t = sigmoid(x@Wz + h@Uz), r_t = sigmoid(x@Wr + h@Ur)
    gates = jax.nn.sigmoid(gx[:, : 2 * H] + gh)
    z_t = gates[:, :H]
    r_t = gates[:, H:]

    # Candidate state: tanh((r_t * h) @ U + x @ W)  -- reset gate applied to h
    # BEFORE the U projection (original module's semantics).
    rh = (r_t * h_f32).astype(mxu_dtype)
    h_t = jnp.tanh(
        jnp.dot(rh, u_ref[...], preferred_element_type=jnp.float32)
        + gx[:, 2 * H:])

    # h_new = z*h + (1-z)*h_t  ==  h_t + z*(h - h_t)   (one fewer multiply)
    out_ref[...] = (h_t + z_t * (h_f32 - h_t)).astype(out_ref.dtype)


def gru_cell(x, h, packed, *, batch_tile=512):
    """Single GRU cell step.

    x: [B, input_size]   h: [B, hidden_size]
    packed: dict with
        "wx": [input_size,  3*hidden_size]  = [Wz | Wr | W]   (pre-transposed)
        "wh": [hidden_size, 2*hidden_size]  = [Uz | Ur]
        "u" : [hidden_size,   hidden_size]
    """
    B, I = x.shape
    H = h.shape[1]
    wx, wh, u = packed["wx"], packed["wh"], packed["u"]
    assert wx.shape == (I, 3 * H) and wh.shape == (H, 2 * H) and u.shape == (H, H)

    # Batch tile: full batch when small, otherwise a multiple of 8 (sublanes).
    if B <= batch_tile:
        tb = B
    else:
        tb = max(8, (batch_tile // 8) * 8)
    grid = (pl.cdiv(B, tb),)

    return pl.pallas_call(
        _gru_cell_kernel,
        out_shape=jax.ShapeDtypeStruct((B, H), h.dtype),
        grid_spec=pltpu.PrefetchScalarGridSpec(
            num_scalar_prefetch=0,
            grid=grid,
            in_specs=[
                # Activations: streamed / double-buffered per batch tile.
                pl.BlockSpec((tb, I), lambda b: (b, 0)),
                pl.BlockSpec((tb, H), lambda b: (b, 0)),
                # Weights: constant index_map -> stay VMEM-resident across grid.
                pl.BlockSpec((I, 3 * H), lambda b: (0, 0)),
                pl.BlockSpec((H, 2 * H), lambda b: (0, 0)),
                pl.BlockSpec((H, H), lambda b: (0, 0)),
            ],
            out_specs=pl.BlockSpec((tb, H), lambda b: (b, 0)),
        ),
        compiler_params=pltpu.CompilerParams(
            dimension_semantics=("parallel",),   # v7x shards batch tiles over 2 TCs
            vmem_limit_bytes=32 * 1024 * 1024,   # > v5e 16 MiB default, < v7x physical
        ),
    )(x, h, wx, wh, u)


def init_params(key, input_size, hidden_size, dtype=jnp.float32):
    """Init mimicking nn.Linear(bias=False): U(-1/sqrt(in_f), 1/sqrt(in_f)).
    Each weight is stored transposed: (in_features, out_features)."""
    keys = jax.random.split(key, 6)

    def lin(k, in_f, out_f):
        bound = 1.0 / jnp.sqrt(in_f)
        w = jax.random.uniform(k, (out_f, in_f), dtype, -bound, bound)  # torch layout
        return w.T                                                      # -> (in, out)

    return {
        "wz": lin(keys[0], input_size, hidden_size),
        "uz": lin(keys[1], hidden_size, hidden_size),
        "wr": lin(keys[2], input_size, hidden_size),
        "ur": lin(keys[3], hidden_size, hidden_size),
        "u":  lin(keys[4], hidden_size, hidden_size),
        "w":  lin(keys[5], input_size, hidden_size),
    }


def pack_params(params, dtype=jnp.bfloat16):
    """Pack the six per-gate weights into the fused layout used by the kernel."""
    return {
        "wx": jnp.concatenate([params["wz"], params["wr"], params["w"]],
                              axis=1).astype(dtype),
        "wh": jnp.concatenate([params["uz"], params["ur"]], axis=1).astype(dtype),
        "u":  params["u"].astype(dtype),
    }


def gru_cell_ref(x, h, params):
    """Pure-JAX f32 reference of the PyTorch forward, for verification."""
    z_t = jax.nn.sigmoid(x @ params["wz"] + h @ params["uz"])
    r_t = jax.nn.sigmoid(x @ params["wr"] + h @ params["ur"])
    h_t = jnp.tanh((r_t * h) @ params["u"] + x @ params["w"])
    return z_t * h + (1.0 - z_t) * h_t


if __name__ == "__main__":
    input_size = 16
    hidden_size = 32
    batch = 8

    key = jax.random.PRNGKey(0)
    kx, kh, kp = jax.random.split(key, 3)

    x = jax.random.normal(kx, (batch, input_size), jnp.float32)
    h = jax.random.normal(kh, (batch, hidden_size), jnp.float32)
    params = init_params(kp, input_size, hidden_size)
    ref = gru_cell_ref(x, h, params)

    # 1) f32 packed weights: tight semantic check against the reference.
    out_f32 = jax.block_until_ready(gru_cell(x, h, pack_params(params, jnp.float32)))
    assert out_f32.shape == (batch, hidden_size)
    err_f32 = float(jnp.max(jnp.abs(out_f32 - ref)))
    assert jnp.allclose(out_f32, ref, atol=1e-4, rtol=1e-4), (
        f"f32 max abs err {err_f32}")

    # 2) bf16 packed weights (the perf path): looser tolerance for bf16 MXU operands.
    out_bf16 = jax.block_until_ready(gru_cell(x, h, pack_params(params, jnp.bfloat16)))
    err_bf16 = float(jnp.max(jnp.abs(out_bf16 - ref)))
    assert jnp.allclose(out_bf16, ref, atol=5e-2, rtol=5e-2), (
        f"bf16 max abs err {err_bf16}")

    print("KERNEL_OK")
</pallas_src>

<mosaic_0001>
module attributes {stable_mosaic.version = 11 : i64} {
  func.func @_gru_cell_kernel(%arg0: i32, %arg1: memref<8x16xf32, #tpu.memory_space<vmem>>, %arg2: memref<8x32xf32, #tpu.memory_space<vmem>>, %arg3: memref<16x96xf32, #tpu.memory_space<vmem>>, %arg4: memref<32x64xf32, #tpu.memory_space<vmem>>, %arg5: memref<32x32xf32, #tpu.memory_space<vmem>>, %arg6: memref<8x32xf32, #tpu.memory_space<vmem>>) attributes {dimension_semantics = [#tpu.dimension_semantics<parallel>], iteration_bounds = array<i64: 1>, scalar_prefetch = 0 : i64, scratch_operands = 0 : i64, tpu.core_type = #tpu.core_type<tc>, window_params = [{transform_indices = @transform_0, window_bounds = array<i64: 8, 16>}, {transform_indices = @transform_1, window_bounds = array<i64: 8, 32>}, {pipeline_mode = #tpu.pipeline_mode<synchronous>, transform_indices = @transform_2, window_bounds = array<i64: 16, 96>}, {pipeline_mode = #tpu.pipeline_mode<synchronous>, transform_indices = @transform_3, window_bounds = array<i64: 32, 64>}, {pipeline_mode = #tpu.pipeline_mode<synchronous>, transform_indices = @transform_4, window_bounds = array<i64: 32, 32>}, {transform_indices = @transform_5, window_bounds = array<i64: 8, 32>}]} {
    %c0 = arith.constant 0 : index
    %c0_0 = arith.constant 0 : index
    %0 = vector.load %arg1[%c0, %c0_0] : memref<8x16xf32, #tpu.memory_space<vmem>>, vector<8x16xf32>
    %c0_1 = arith.constant 0 : index
    %c0_2 = arith.constant 0 : index
    %1 = vector.load %arg2[%c0_1, %c0_2] : memref<8x32xf32, #tpu.memory_space<vmem>>, vector<8x32xf32>
    %c0_3 = arith.constant 0 : index
    %c0_4 = arith.constant 0 : index
    %2 = vector.load %arg3[%c0_3, %c0_4] : memref<16x96xf32, #tpu.memory_space<vmem>>, vector<16x96xf32>
    %cst = arith.constant dense<0.000000e+00> : vector<8x96xf32>
    %3 = tpu.matmul %0, %2, %cst {dimension_numbers = #tpu.dot_dimension_numbers<[1], [0], [0], [1], [0, 0, 1, 1], [], []>} : vector<8x16xf32>, vector<16x96xf32>, vector<8x96xf32> -> vector<8x96xf32>
    %c0_5 = arith.constant 0 : index
    %c0_6 = arith.constant 0 : index
    %4 = vector.load %arg4[%c0_5, %c0_6] : memref<32x64xf32, #tpu.memory_space<vmem>>, vector<32x64xf32>
    %cst_7 = arith.constant dense<0.000000e+00> : vector<8x64xf32>
    %5 = tpu.matmul %1, %4, %cst_7 {dimension_numbers = #tpu.dot_dimension_numbers<[1], [0], [0], [1], [0, 0, 1, 1], [], []>} : vector<8x32xf32>, vector<32x64xf32>, vector<8x64xf32> -> vector<8x64xf32>
    %6 = vector.extract_strided_slice %3 {offsets = [0, 0], sizes = [8, 64], strides = [1, 1]} : vector<8x96xf32> to vector<8x64xf32>
    %7 = arith.addf %6, %5 : vector<8x64xf32>
    %8 = arith.negf %7 : vector<8x64xf32>
    %9 = math.exp %8 : vector<8x64xf32>
    %cst_8 = arith.constant 1.000000e+00 : f32
    %10 = vector.broadcast %cst_8 : f32 to vector<8x64xf32>
    %11 = arith.addf %10, %9 : vector<8x64xf32>
    %12 = arith.divf %10, %11 : vector<8x64xf32>
    %13 = vector.extract_strided_slice %12 {offsets = [0, 0], sizes = [8, 32], strides = [1, 1]} : vector<8x64xf32> to vector<8x32xf32>
    %14 = vector.extract_strided_slice %12 {offsets = [0, 32], sizes = [8, 32], strides = [1, 1]} : vector<8x64xf32> to vector<8x32xf32>
    %15 = arith.mulf %14, %1 : vector<8x32xf32>
    %c0_9 = arith.constant 0 : index
    %c0_10 = arith.constant 0 : index
    %16 = vector.load %arg5[%c0_9, %c0_10] : memref<32x32xf32, #tpu.memory_space<vmem>>, vector<32x32xf32>
    %cst_11 = arith.constant dense<0.000000e+00> : vector<8x32xf32>
    %17 = tpu.matmul %15, %16, %cst_11 {dimension_numbers = #tpu.dot_dimension_numbers<[1], [0], [0], [1], [0, 0, 1, 1], [], []>} : vector<8x32xf32>, vector<32x32xf32>, vector<8x32xf32> -> vector<8x32xf32>
    %18 = vector.extract_strided_slice %3 {offsets = [0, 64], sizes = [8, 32], strides = [1, 1]} : vector<8x96xf32> to vector<8x32xf32>
    %19 = arith.addf %17, %18 : vector<8x32xf32>
    %20 = math.tanh %19 : vector<8x32xf32>
    %21 = arith.subf %1, %20 : vector<8x32xf32>
    %22 = arith.mulf %13, %21 : vector<8x32xf32>
    %23 = arith.addf %20, %22 : vector<8x32xf32>
    %c0_12 = arith.constant 0 : index
    %c0_13 = arith.constant 0 : index
    %24 = vector.load %arg6[%c0_12, %c0_13] : memref<8x32xf32, #tpu.memory_space<vmem>>, vector<8x32xf32>
    tpu.vector_store %arg6[%c0_12, %c0_13], %23 {strides = array<i32>} : memref<8x32xf32, #tpu.memory_space<vmem>>, vector<8x32xf32>,
    return
  }
  func.func @transform_0(%arg0: i32) -> (i32, i32) {
    %c0_i32 = arith.constant 0 : i32
    %c0_i32_0 = arith.constant 0 : i32
    return %arg0, %c0_i32 : i32, i32
  }
  func.func @transform_1(%arg0: i32) -> (i32, i32) {
    %c0_i32 = arith.constant 0 : i32
    %c0_i32_0 = arith.constant 0 : i32
    return %arg0, %c0_i32 : i32, i32
  }
  func.func @transform_2(%arg0: i32) -> (i32, i32) {
    %c0_i32 = arith.constant 0 : i32
    %c0_i32_0 = arith.constant 0 : i32
    %c0_i32_1 = arith.constant 0 : i32
    return %c0_i32, %c0_i32_0 : i32, i32
  }
  func.func @transform_3(%arg0: i32) -> (i32, i32) {
    %c0_i32 = arith.constant 0 : i32
    %c0_i32_0 = arith.constant 0 : i32
    %c0_i32_1 = arith.constant 0 : i32
    return %c0_i32, %c0_i32_0 : i32, i32
  }
  func.func @transform_4(%arg0: i32) -> (i32, i32) {
    %c0_i32 = arith.constant 0 : i32
    %c0_i32_0 = arith.constant 0 : i32
    %c0_i32_1 = arith.constant 0 : i32
    return %c0_i32, %c0_i32_0 : i32, i32
  }
  func.func @transform_5(%arg0: i32) -> (i32, i32) {
    %c0_i32 = arith.constant 0 : i32
    %c0_i32_0 = arith.constant 0 : i32
    return %arg0, %c0_i32 : i32, i32
  }
}

</mosaic_0001>

<llo_original>
// kernel: tpu_custom_call.1
$region0: #{tpu_custom_call.1}
  #allocation0 [shape = 'u32[]', space=smem, size = 0x4, offset = 0x4, fixed_abs, tag = 'smem constant byte address 0x4 - core index']
  #allocation1 [shape = 'u32[144,128]{1,0:T(1,128)}', space=vmem, size = 0x12000, scoped, tag = 'internal scratch']
  %s0 = inlined_call_operand.hbm [shape: f32[8,16], index: 0, kind: input, shape index: {}]
  %s1 = inlined_call_operand.hbm [shape: f32[8,32], index: 1, kind: input, shape index: {}]
  %s2 = inlined_call_operand.hbm [shape: f32[16,96], index: 2, kind: input, shape index: {}]
  %s3 = inlined_call_operand.hbm [shape: f32[32,64], index: 3, kind: input, shape index: {}]
  %s4 = inlined_call_operand.hbm [shape: f32[32,32], index: 4, kind: input, shape index: {}]
  %s5 = inlined_call_operand.hbm [shape: f32[8,32], index: 5, kind: output, shape index: {}]
  %s6 = sld [smem:[#allocation0]]
  $region50: #{tpu_custom_call.1} parent=0
    _
  %s8 = ssub.s32 1, %s6
  %s9 = scalar_select 0, %s8, %s6
  $region1: #{tpu_custom_call.1} parent=0
    #allocation2 [shape = 'u8[4096]{0}', space=vmem, size = 0x1000, scoped, tag = 'input window, operand 0, single buffered']
    #allocation3 [shape = 's32[1]{0}', space=sflag, size = 0x4, scoped, tag = 'scoped memory for tpu_custom_call.1']
    #allocation4 [shape = 's32[1]{0}', space=sflag, size = 0x4, scoped, tag = 'scoped memory for tpu_custom_call.1']
    #allocation5 [shape = 'u8[4096]{0}', space=vmem, size = 0x1000, scoped, tag = 'input window, operand 1, single buffered']
    #allocation6 [shape = 's32[1]{0}', space=sflag, size = 0x4, scoped, tag = 'scoped memory for tpu_custom_call.1']
    #allocation7 [shape = 'u8[8192]{0}', space=vmem, size = 0x2000, scoped, tag = 'input window, operand 2, single buffered']
    #allocation8 [shape = 'u8[16384]{0}', space=vmem, size = 0x4000, scoped, tag = 'input window, operand 3, single buffered']
    #allocation9 [shape = 's32[1]{0}', space=sflag, size = 0x4, scoped, tag = 'scoped memory for tpu_custom_call.1']
    #allocation10 [shape = 'u8[16384]{0}', space=vmem, size = 0x4000, scoped, tag = 'input window, operand 4, single buffered']
    #allocation11 [shape = 'u8[4096]{0}', space=vmem, size = 0x1000, scoped, tag = 'output window, operand 0, single buffered']
    %10 = vsyncpa [#allocation3], 0
    %11 = vsyncpa [#allocation6], 0
    %12 = vsyncpa [#allocation9], 0
    %13 = vsyncpa [#allocation4], 0
    // Predicated region
    $region2: #{tpu_custom_call.1} parent=1 // pred_check
      _
    $region3: #{tpu_custom_call.1} parent=1 // pred_check_branch
      %15 = sbr.rel (0) target = $region5
    $region4: #{tpu_custom_call.1} parent=1 // pred_region
      %s17 = ssub.s32 128, 128
      %18 = vsyncadd [#allocation3], %s17
      %s20 = sshll.u32 [#allocation2], 4
      %s21 = int_to_ptr.vmem [resolvable:$true] %s20
      %23 = dma.hbm_to_vmem [thread:$0]  %s0, 128, %s21, [#allocation3]
    $region5: #{tpu_custom_call.1} parent=1 // pred_fallthru
      _
    // Predicated region
    $region6: #{tpu_custom_call.1} parent=1 // pred_check
      _
    $region7: #{tpu_custom_call.1} parent=1 // pred_check_branch
      %25 = sbr.rel (0) target = $region9
    $region8: #{tpu_custom_call.1} parent=1 // pred_region
      %s27 = ssub.s32 128, 128
      %28 = vsyncadd [#allocation6], %s27
      %s30 = sshll.u32 [#allocation5], 4
      %s31 = int_to_ptr.vmem [resolvable:$true] %s30
      %33 = dma.hbm_to_vmem [thread:$0]  %s1, 128, %s31, [#allocation6]
    $region9: #{tpu_custom_call.1} parent=1 // pred_fallthru
      _
    // Predicated region
    $region10: #{tpu_custom_call.1} parent=1 // pred_check
      _
    $region11: #{tpu_custom_call.1} parent=1 // pred_check_branch
      %35 = sbr.rel (0) target = $region13
    $region12: #{tpu_custom_call.1} parent=1 // pred_region
      %s37 = ssub.s32 256, 256
      %38 = vsyncadd [#allocation6], %s37
      %s39 = sshll.u32 [#allocation7], 4
      %s40 = int_to_ptr.vmem [resolvable:$true] %s39
      %45 = dma.hbm_to_vmem [thread:$0]  %s2, 256, %s40, [#allocation6], 128, 128, 8
    $region13: #{tpu_custom_call.1} parent=1 // pred_fallthru
      _
    // Predicated region
    $region14: #{tpu_custom_call.1} parent=1 // pred_check
      _
    $region15: #{tpu_custom_call.1} parent=1 // pred_check_branch
      %47 = sbr.rel (0) target = $region17
    $region16: #{tpu_custom_call.1} parent=1 // pred_region
      %s49 = ssub.s32 512, 512
      %50 = vsyncadd [#allocation9], %s49
      %s51 = sshll.u32 [#allocation8], 4
      %s52 = int_to_ptr.vmem [resolvable:$true] %s51
      %57 = dma.hbm_to_vmem [thread:$0]  %s3, 512, %s52, [#allocation9], 128, 128, 8
    $region17: #{tpu_custom_call.1} parent=1 // pred_fallthru
      _
    // Predicated region
    $region18: #{tpu_custom_call.1} parent=1 // pred_check
      _
    $region19: #{tpu_custom_call.1} parent=1 // pred_check_branch
      %59 = sbr.rel (0) target = $region21
    $region20: #{tpu_custom_call.1} parent=1 // pred_region
      %s61 = ssub.s32 512, 512
      %62 = vsyncadd [#allocation9], %s61
      %s63 = sshll.u32 [#allocation10], 4
      %s64 = int_to_ptr.vmem [resolvable:$true] %s63
      %69 = dma.hbm_to_vmem [thread:$0]  %s4, 512, %s64, [#allocation9], 128, 128, 8
    $region21: #{tpu_custom_call.1} parent=1 // pred_fallthru
      _
    // Predicated region
    $region22: #{tpu_custom_call.1} parent=1 // pred_check
      _
    $region23: #{tpu_custom_call.1} parent=1 // pred_check_branch
      %71 = sbr.rel (0) target = $region25
    $region24: #{tpu_custom_call.1} parent=1 // pred_region
      %72 = dma.done [#allocation3], 128
    $region25: #{tpu_custom_call.1} parent=1 // pred_fallthru
      _
    // Predicated region
    $region26: #{tpu_custom_call.1} parent=1 // pred_check
      _
    $region27: #{tpu_custom_call.1} parent=1 // pred_check_branch
      %74 = sbr.rel (0) target = $region29
    $region28: #{tpu_custom_call.1} parent=1 // pred_region
      %75 = dma.done [#allocation6], 128
    $region29: #{tpu_custom_call.1} parent=1 // pred_fallthru
      _
    // Predicated region
    $region30: #{tpu_custom_call.1} parent=1 // pred_check
      _
    $region31: #{tpu_custom_call.1} parent=1 // pred_check_branch
      %77 = sbr.rel (0) target = $region33
    $region32: #{tpu_custom_call.1} parent=1 // pred_region
      %78 = dma.done [#allocation6], 256
    $region33: #{tpu_custom_call.1} parent=1 // pred_fallthru
      _
    // Predicated region
    $region34: #{tpu_custom_call.1} parent=1 // pred_check
      _
    $region35: #{tpu_custom_call.1} parent=1 // pred_check_branch
      %80 = sbr.rel (0) target = $region37
    $region36: #{tpu_custom_call.1} parent=1 // pred_region
      %81 = dma.done [#allocation9], 512
    $region37: #{tpu_custom_call.1} parent=1 // pred_fallthru
      _
    // Predicated region
    $region38: #{tpu_custom_call.1} parent=1 // pred_check
      _
    $region39: #{tpu_custom_call.1} parent=1 // pred_check_branch
      %83 = sbr.rel (0) target = $region41
    $region40: #{tpu_custom_call.1} parent=1 // pred_region
      %84 = dma.done [#allocation9], 512
    $region41: #{tpu_custom_call.1} parent=1 // pred_fallthru
      _
    %v85 = vld [vmem:[#allocation2] sm:$0xff]
    %v86 = vld [vmem:[#allocation5] sm:$0xff]
    %v87 = vld [vmem:[#allocation7] sm:$0xff]
    %v88 = vld [vmem:[#allocation7 + $0x8] sm:$0xff]
    %vm89 = vcmask 130048
    %v91 = vsel %vm89, %v85, 0
    %93 = vmatprep.subr.mxu0 0.0
    %94 = vmatpush1.msra.mxu0 0.0
    %95 = vmatprep.subr.mxu0 0.0
    %96 = vmatpush1.msra.mxu0 0.0
    %97 = vmatprep.subr.mxu0 0.0
    %98 = vmatpush1.msra.mxu0 0.0
    %99 = vmatprep.subr.mxu0 0.0
    %100 = vmatpush1.msra.mxu0 0.0
    %101 = vmatprep.subr.mxu0 0.0
    %102 = vmatpush1.msra.mxu0 0.0
    %103 = vmatprep.subr.mxu0 0.0
    %104 = vmatpush1.msra.mxu0 0.0
    %105 = vmatprep.subr.mxu0 0.0
    %106 = vmatpush1.msra.mxu0 0.0
    %107 = vmatprep.subr.mxu0 0.0
    %108 = vmatpush1.msra.mxu0 0.0
    %109 = vmatprep.subr.mxu0 0.0
    %110 = vmatpush1.msra.mxu0 0.0
    %111 = vmatprep.subr.mxu0 0.0
    %112 = vmatpush1.msra.mxu0 0.0
    %113 = vmatprep.subr.mxu0 0.0
    %114 = vmatpush1.msra.mxu0 0.0
    %115 = vmatprep.subr.mxu0 0.0
    %116 = vmatpush1.msra.mxu0 0.0
    %117 = vmatprep.subr.mxu0 0.0
    %118 = vmatpush1.msra.mxu0 0.0
    %119 = vmatprep.subr.mxu0 0.0
    %120 = vmatpush1.msra.mxu0 0.0
    %121 = vmatprep.subr.mxu0 0.0
    %122 = vmatpush1.msra.mxu0 %v88
    %123 = vmatprep.subr.mxu0 0.0
    %124 = vmatpush1.msra.mxu0 %v87
    %125 = vmatprep.subr.mxu0 0.0
    %126 = vmatpush2.msra.mxu0 0.0
    %127 = vmatprep.subr.mxu0 0.0
    %128 = vmatpush2.msra.mxu0 0.0
    %129 = vmatprep.subr.mxu0 0.0
    %130 = vmatpush2.msra.mxu0 0.0
    %131 = vmatprep.subr.mxu0 0.0
    %132 = vmatpush2.msra.mxu0 0.0
    %133 = vmatprep.subr.mxu0 0.0
    %134 = vmatpush2.msra.mxu0 0.0
    %135 = vmatprep.subr.mxu0 0.0
    %136 = vmatpush2.msra.mxu0 0.0
    %137 = vmatprep.subr.mxu0 0.0
    %138 = vmatpush2.msra.mxu0 0.0
    %139 = vmatprep.subr.mxu0 0.0
    %140 = vmatpush2.msra.mxu0 0.0
    %141 = vmatprep.subr.mxu0 0.0
    %142 = vmatpush2.msra.mxu0 0.0
    %143 = vmatprep.subr.mxu0 0.0
    %144 = vmatpush2.msra.mxu0 0.0
    %145 = vmatprep.subr.mxu0 0.0
    %146 = vmatpush2.msra.mxu0 0.0
    %147 = vmatprep.subr.mxu0 0.0
    %148 = vmatpush2.msra.mxu0 0.0
    %149 = vmatprep.subr.mxu0 0.0
    %150 = vmatpush2.msra.mxu0 0.0
    %151 = vmatprep.subr.mxu0 0.0
    %152 = vmatpush2.msra.mxu0 0.0
    %153 = vmatprep.subr.mxu0 0.0
    %154 = vmatpush2.msra.mxu0 0.0
    %155 = vmatprep.subr.mxu0 0.0
    %156 = vmatpush2.msra.mxu0 0.0
    %157 = vmatprep.mubr.f32.mxu0 0.0
    %158 = vmatmul.mubr.f32.gmra.mxu0 %v91
    %v159 = vpop.f32.mrf.mxu0
    %v160 = vadd.f32 0.0, %v159
    %v161 = vpop.f32.mrf.mxu0
    %162 = vdwg.mxu0
    %v163 = vld [vmem:[#allocation8] sm:$0xff]
    %v164 = vld [vmem:[#allocation8 + $0x8] sm:$0xff]
    %v165 = vld [vmem:[#allocation8 + $0x10] sm:$0xff]
    %v166 = vld [vmem:[#allocation8 + $0x18] sm:$0xff]
    %vm167 = vcmask 261120
    %v169 = vsel %vm167, %v86, 0
    %171 = vmatprep.subr.mxu0 0.0
    %172 = vmatpush1.msra.mxu0 0.0
    %173 = vmatprep.subr.mxu0 0.0
    %174 = vmatpush1.msra.mxu0 0.0
    %175 = vmatprep.subr.mxu0 0.0
    %176 = vmatpush1.msra.mxu0 0.0
    %177 = vmatprep.subr.mxu0 0.0
    %178 = vmatpush1.msra.mxu0 0.0
    %179 = vmatprep.subr.mxu0 0.0
    %180 = vmatpush1.msra.mxu0 0.0
    %181 = vmatprep.subr.mxu0 0.0
    %182 = vmatpush1.msra.mxu0 0.0
    %183 = vmatprep.subr.mxu0 0.0
    %184 = vmatpush1.msra.mxu0 0.0
    %185 = vmatprep.subr.mxu0 0.0
    %186 = vmatpush1.msra.mxu0 0.0
    %187 = vmatprep.subr.mxu0 0.0
    %188 = vmatpush1.msra.mxu0 0.0
    %189 = vmatprep.subr.mxu0 0.0
    %190 = vmatpush1.msra.mxu0 0.0
    %191 = vmatprep.subr.mxu0 0.0
    %192 = vmatpush1.msra.mxu0 0.0
    %193 = vmatprep.subr.mxu0 0.0
    %194 = vmatpush1.msra.mxu0 0.0
    %195 = vmatprep.subr.mxu0 0.0
    %196 = vmatpush1.msra.mxu0 %v166
    %197 = vmatprep.subr.mxu0 0.0
    %198 = vmatpush1.msra.mxu0 %v165
    %199 = vmatprep.subr.mxu0 0.0
    %200 = vmatpush1.msra.mxu0 %v164
    %201 = vmatprep.subr.mxu0 0.0
    %202 = vmatpush1.msra.mxu0 %v163
    %203 = vmatprep.subr.mxu0 0.0
    %204 = vmatpush2.msra.mxu0 0.0
    %205 = vmatprep.subr.mxu0 0.0
    %206 = vmatpush2.msra.mxu0 0.0
    %207 = vmatprep.subr.mxu0 0.0
    %208 = vmatpush2.msra.mxu0 0.0
    %209 = vmatprep.subr.mxu0 0.0
    %210 = vmatpush2.msra.mxu0 0.0
    %211 = vmatprep.subr.mxu0 0.0
    %212 = vmatpush2.msra.mxu0 0.0
    %213 = vmatprep.subr.mxu0 0.0
    %214 = vmatpush2.msra.mxu0 0.0
    %215 = vmatprep.subr.mxu0 0.0
    %216 = vmatpush2.msra.mxu0 0.0
    %217 = vmatprep.subr.mxu0 0.0
    %218 = vmatpush2.msra.mxu0 0.0
    %219 = vmatprep.subr.mxu0 0.0
    %220 = vmatpush2.msra.mxu0 0.0
    %221 = vmatprep.subr.mxu0 0.0
    %222 = vmatpush2.msra.mxu0 0.0
    %223 = vmatprep.subr.mxu0 0.0
    %224 = vmatpush2.msra.mxu0 0.0
    %225 = vmatprep.subr.mxu0 0.0
    %226 = vmatpush2.msra.mxu0 0.0
    %227 = vmatprep.subr.mxu0 0.0
    %228 = vmatpush2.msra.mxu0 0.0
    %229 = vmatprep.subr.mxu0 0.0
    %230 = vmatpush2.msra.mxu0 0.0
    %231 = vmatprep.subr.mxu0 0.0
    %232 = vmatpush2.msra.mxu0 0.0
    %233 = vmatprep.subr.mxu0 0.0
    %234 = vmatpush2.msra.mxu0 0.0
    %235 = vmatprep.mubr.f32.mxu0 0.0
    %236 = vmatmul.mubr.f32.gmra.mxu0 %v169
    %v237 = vpop.f32.mrf.mxu0
    %v238 = vadd.f32 0.0, %v237
    %v239 = vpop.f32.mrf.mxu0
    %240 = vdwg.mxu0
    %v241 = vadd.f32 %v160, %v238
    %v242 = vxor.u32 %v241, 2147483648
    %v243 = vmul.f32 %v242, 1.442695
    %v244 = vpow.pop %v243
    %v245 = vadd.f32 %v244, 1.0
    %v246 = vrcp.pop %v245
    %v247 = vmul.f32 1.0, %v246
    %248 = vrot.lane.b32.xlu0 %v86, 32
    %v249 = vpop.permute.xlu0 %248
    %v251 = vmul.f32 %v247, %v249
    %v252 = vld [vmem:[#allocation10] sm:$0xff]
    %v253 = vld [vmem:[#allocation10 + $0x8] sm:$0xff]
    %v254 = vld [vmem:[#allocation10 + $0x10] sm:$0xff]
    %v255 = vld [vmem:[#allocation10 + $0x18] sm:$0xff]
    %257 = vrot.lane.b32.xlu0 %v251, 96
    %v258 = vpop.permute.xlu0 %257
    %260 = vrot.lane.b32.xlu0 %v160, 64
    %v261 = vpop.permute.xlu0 %260
    %v263 = vsel %vm167, %v258, 0
    %265 = vmatprep.subr.mxu0 0.0
    %266 = vmatpush1.msra.mxu0 0.0
    %267 = vmatprep.subr.mxu0 0.0
    %268 = vmatpush1.msra.mxu0 0.0
    %269 = vmatprep.subr.mxu0 0.0
    %270 = vmatpush1.msra.mxu0 0.0
    %271 = vmatprep.subr.mxu0 0.0
    %272 = vmatpush1.msra.mxu0 0.0
    %273 = vmatprep.subr.mxu0 0.0
    %274 = vmatpush1.msra.mxu0 0.0
    %275 = vmatprep.subr.mxu0 0.0
    %276 = vmatpush1.msra.mxu0 0.0
    %277 = vmatprep.subr.mxu0 0.0
    %278 = vmatpush1.msra.mxu0 0.0
    %279 = vmatprep.subr.mxu0 0.0
    %280 = vmatpush1.msra.mxu0 0.0
    %281 = vmatprep.subr.mxu0 0.0
    %282 = vmatpush1.msra.mxu0 0.0
    %283 = vmatprep.subr.mxu0 0.0
    %284 = vmatpush1.msra.mxu0 0.0
    %285 = vmatprep.subr.mxu0 0.0
    %286 = vmatpush1.msra.mxu0 0.0
    %287 = vmatprep.subr.mxu0 0.0
    %288 = vmatpush1.msra.mxu0 0.0
    %289 = vmatprep.subr.mxu0 0.0
    %290 = vmatpush1.msra.mxu0 %v255
    %291 = vmatprep.subr.mxu0 0.0
    %292 = vmatpush1.msra.mxu0 %v254
    %293 = vmatprep.subr.mxu0 0.0
    %294 = vmatpush1.msra.mxu0 %v253
    %295 = vmatprep.subr.mxu0 0.0
    %296 = vmatpush1.msra.mxu0 %v252
    %297 = vmatprep.subr.mxu0 0.0
    %298 = vmatpush2.msra.mxu0 0.0
    %299 = vmatprep.subr.mxu0 0.0
    %300 = vmatpush2.msra.mxu0 0.0
    %301 = vmatprep.subr.mxu0 0.0
    %302 = vmatpush2.msra.mxu0 0.0
    %303 = vmatprep.subr.mxu0 0.0
    %304 = vmatpush2.msra.mxu0 0.0
    %305 = vmatprep.subr.mxu0 0.0
    %306 = vmatpush2.msra.mxu0 0.0
    %307 = vmatprep.subr.mxu0 0.0
    %308 = vmatpush2.msra.mxu0 0.0
    %309 = vmatprep.subr.mxu0 0.0
    %310 = vmatpush2.msra.mxu0 0.0
    %311 = vmatprep.subr.mxu0 0.0
    %312 = vmatpush2.msra.mxu0 0.0
    %313 = vmatprep.subr.mxu0 0.0
    %314 = vmatpush2.msra.mxu0 0.0
    %315 = vmatprep.subr.mxu0 0.0
    %316 = vmatpush2.msra.mxu0 0.0
    %317 = vmatprep.subr.mxu0 0.0
    %318 = vmatpush2.msra.mxu0 0.0
    %319 = vmatprep.subr.mxu0 0.0
    %320 = vmatpush2.msra.mxu0 0.0
    %321 = vmatprep.subr.mxu0 0.0
    %322 = vmatpush2.msra.mxu0 0.0
    %323 = vmatprep.subr.mxu0 0.0
    %324 = vmatpush2.msra.mxu0 0.0
    %325 = vmatprep.subr.mxu0 0.0
    %326 = vmatpush2.msra.mxu0 0.0
    %327 = vmatprep.subr.mxu0 0.0
    %328 = vmatpush2.msra.mxu0 0.0
    %329 = vmatprep.mubr.f32.mxu0 0.0
    %330 = vmatmul.mubr.f32.gmra.mxu0 %v263
    %v331 = vpop.f32.mrf.mxu0
    %v332 = vadd.f32 %v261, %v331
    %v333 = vpop.f32.mrf.mxu0
    %334 = vdwg.mxu0
    %v335 = vtanh.pop %v332
    %v336 = vsub.f32 %v86, %v335
    %v337 = vmul.f32 %v247, %v336
    %v338 = vadd.f32 %v335, %v337
    %339 = vst.msk [vmem:[#allocation11] sm:$0xff] %vm167, %v338
    // Predicated region
    $region42: #{tpu_custom_call.1} parent=1 // pred_check
      _
    $region43: #{tpu_custom_call.1} parent=1 // pred_check_branch
      %341 = sbr.rel (0) target = $region45
    $region44: #{tpu_custom_call.1} parent=1 // pred_region
      %s343 = ssub.s32 128, 128
      %344 = vsyncadd [#allocation4], %s343
      %s346 = sshll.u32 [#allocation11], 4
      %s347 = int_to_ptr.vmem [resolvable:$true] %s346
      %349 = dma.vmem_to_hbm [thread:$0]  %s347, 128, %s5, [#allocation4]
    $region45: #{tpu_custom_call.1} parent=1 // pred_fallthru
      _
    // Predicated region
    $region46: #{tpu_custom_call.1} parent=1 // pred_check
      _
    $region47: #{tpu_custom_call.1} parent=1 // pred_check_branch
      %351 = sbr.rel (0) target = $region49
    $region48: #{tpu_custom_call.1} parent=1 // pred_region
      %352 = dma.done [#allocation4], 128
    $region49: #{tpu_custom_call.1} parent=1 // pred_fallthru
      _
    %353 = vsyncpa [#allocation3], 1
    %354 = vsyncpa [#allocation6], 1
    %355 = vsyncpa [#allocation9], 1
    %356 = vsyncpa [#allocation4], 1

</llo_original>
